<compile_context>
chip_gen: v5e
topology: v5e:2x2
jax: 0.10.0
libtpu: 0.0.40
codegen_flags: <defaults>
</compile_context>

<pallas_src>
import functools

import jax
import jax.numpy as jnp
from jax.experimental import pallas as pl
from jax.experimental.pallas import tpu as pltpu


def _make_divisible(v, divisor, min_value=None):
    if min_value is None:
        min_value = divisor
    new_v = max(min_value, int(v + divisor / 2) // divisor * divisor)
    if new_v < 0.9 * v:
        new_v += divisor
    return new_v


def _se_kernel(x_ref, w1_ref, b1_ref, w2_ref, b2_ref, o_ref, *, inv_hw):
    # x_ref/o_ref: (TB, C, HW).  Param refs have constant index_maps -> VMEM-resident.
    x = x_ref[...]                                            # (TB, C, HW)
    # Adaptive avg pool over spatial; accumulate in f32 regardless of input dtype.
    y = jnp.sum(x.astype(jnp.float32), axis=-1) * inv_hw      # (TB, C)
    h = jnp.dot(y, w1_ref[...],
                preferred_element_type=jnp.float32) + b1_ref[...]
    h = jnp.maximum(h, 0.0)                                   # ReLU
    s = jnp.dot(h, w2_ref[...],
                preferred_element_type=jnp.float32) + b2_ref[...]
    scale = jnp.clip(s + 3.0, 0.0, 6.0) * (1.0 / 6.0)         # h_sigmoid = relu6(s+3)/6
    o_ref[...] = (x.astype(jnp.float32) * scale[:, :, None]).astype(o_ref.dtype)


def _chip_generation():
    try:
        kind = jax.devices()[0].device_kind.lower()
    except Exception:
        kind = ""
    if "v7" in kind:
        return "v7x"
    if "v6" in kind or "v5" in kind:
        return "v5v6"
    return "other"


def _tiling_params():
    """(target_block_bytes, vmem_cap_bytes, min_grid_steps) per TPU generation."""
    gen = _chip_generation()
    if gen == "v7x":
        # 64 MiB VMEM, 2 TCs sharing the grid: modest blocks, many steps, headroom.
        return 8 << 20, 48 << 20, 8
    if gen == "v5v6":
        # 128 MiB VMEM, 1 TC: bigger blocks, higher limit (v5e default scoped VMEM is
        # only 16 MiB, so the explicit override stays necessary there).
        return 16 << 20, 100 << 20, 4
    return 8 << 20, 48 << 20, 4


def se_layer(x, w1, b1, w2, b2):
    """x: (B, C, H, W).  w1: (hid, C), b1: (hid,), w2: (C, hid), b2: (C,)  (nn.Linear layout)."""
    B, C, H, W = x.shape
    hid = w1.shape[0]
    HW = H * W

    # Free reshape (merges trailing dims, no HBM pass).  No padding, no output slice.
    x_flat = x.reshape(B, C, HW)

    target_block_bytes, vmem_cap, min_steps = _tiling_params()
    itemsize = jnp.dtype(x.dtype).itemsize
    per_batch_bytes = C * HW * itemsize

    tb_bytes = max(1, target_block_bytes // max(per_batch_bytes, 1))
    tb_steps = max(1, B // min_steps)      # keep >= min_steps grid steps when B allows
    TB = max(1, min(B, tb_bytes, tb_steps))
    grid = (pl.cdiv(B, TB),)               # partial last block: masked, per-batch-independent
    blk_bytes = TB * per_batch_bytes
    # TODO(synk): if a single batch slab (C*HW) alone blows the VMEM budget (esp. v7x
    # 64 MiB), switch to a 2-pass spatially-tiled scheme (tiled mean + tiled scale).
    # TODO(synk): for tiny/odd C (not a multiple of 8 in f32), fold batch into the
    # sublane dim (view blocks as (TB*C, HW)) to avoid sublane padding; standard
    # MobileNetV3 channel counts don't need it.

    # Glue: pre-transpose weights / reshape biases to lane-friendly 2-D (tiny tensors).
    w1_t = jnp.transpose(w1)          # (C, hid)
    w2_t = jnp.transpose(w2)          # (hid, C)
    b1_2d = b1.reshape(1, hid)
    b2_2d = b2.reshape(1, C)

    param_bytes = int((w1_t.size + w2_t.size + b1_2d.size + b2_2d.size)
                      * jnp.dtype(w1.dtype).itemsize)
    cost = pl.CostEstimate(
        flops=2 * B * C * HW + 4 * B * C * hid,
        transcendentals=0,
        bytes_accessed=2 * B * C * HW * itemsize + param_bytes,
    )
    # Double-buffered in + out blocks (+params + slack), clamped per-generation.
    vmem_limit = int(min(vmem_cap,
                         max(32 << 20, 4 * blk_bytes + param_bytes + (2 << 20))))

    out = pl.pallas_call(
        functools.partial(_se_kernel, inv_hw=1.0 / HW),
        out_shape=jax.ShapeDtypeStruct((B, C, HW), x.dtype),
        grid=grid,
        in_specs=[
            pl.BlockSpec((TB, C, HW), lambda b: (b, 0, 0)),   # x: batch-tile block
            pl.BlockSpec((C, hid), lambda b: (0, 0)),         # w1: fetched once
            pl.BlockSpec((1, hid), lambda b: (0, 0)),         # b1: fetched once
            pl.BlockSpec((hid, C), lambda b: (0, 0)),         # w2: fetched once
            pl.BlockSpec((1, C), lambda b: (0, 0)),           # b2: fetched once
        ],
        out_specs=pl.BlockSpec((TB, C, HW), lambda b: (b, 0, 0)),
        input_output_aliases={0: 0},      # output reuses x_flat's HBM buffer
        compiler_params=pltpu.CompilerParams(
            dimension_semantics=("parallel",),
            vmem_limit_bytes=vmem_limit,
        ),
        cost_estimate=cost,
    )(x_flat, w1_t, b1_2d, w2_t, b2_2d)

    return out.reshape(B, C, H, W)


def se_ref(x, w1, b1, w2, b2):
    """Pure-JAX reference matching PyTorch semantics."""
    y = x.mean(axis=(2, 3))                               # (B, C)
    h = jnp.maximum(y @ w1.T + b1, 0.0)
    s = h @ w2.T + b2
    scale = jnp.clip(s + 3.0, 0.0, 6.0) / 6.0
    return x * scale[:, :, None, None]


if __name__ == "__main__":
    B, C, H, W = 2, 4, 16, 16
    reduction = 4
    hid = _make_divisible(C // reduction, 8)              # -> 8

    key = jax.random.PRNGKey(0)
    kx, k1, k2, k3, k4 = jax.random.split(key, 5)
    x = jax.random.normal(kx, (B, C, H, W), dtype=jnp.float32)
    # deterministic synthetic parameters (nn.Linear weight shapes: (out, in))
    w1 = 0.1 * jax.random.normal(k1, (hid, C), dtype=jnp.float32)
    b1 = 0.1 * jax.random.normal(k2, (hid,), dtype=jnp.float32)
    w2 = 0.1 * jax.random.normal(k3, (C, hid), dtype=jnp.float32)
    b2 = 0.1 * jax.random.normal(k4, (C,), dtype=jnp.float32)

    # Reference computed first (the kernel call aliases its input buffer to its output).
    ref = jax.block_until_ready(se_ref(x, w1, b1, w2, b2))

    out = jax.block_until_ready(se_layer(x, w1, b1, w2, b2))

    assert out.shape == (B, C, H, W)
    assert jnp.allclose(out, ref, atol=1e-5, rtol=1e-5), "mismatch vs reference"
    print("KERNEL_OK")
</pallas_src>

<mosaic_0001>
module attributes {stable_mosaic.version = 11 : i64} {
  func.func @_se_kernel(%arg0: i32, %arg1: memref<1x4x256xf32, #tpu.memory_space<vmem>>, %arg2: memref<4x8xf32, #tpu.memory_space<vmem>>, %arg3: memref<1x8xf32, #tpu.memory_space<vmem>>, %arg4: memref<8x4xf32, #tpu.memory_space<vmem>>, %arg5: memref<1x4xf32, #tpu.memory_space<vmem>>, %arg6: memref<1x4x256xf32, #tpu.memory_space<vmem>>) attributes {dimension_semantics = [#tpu.dimension_semantics<parallel>], iteration_bounds = array<i64: 2>, scalar_prefetch = 0 : i64, scratch_operands = 0 : i64, tpu.core_type = #tpu.core_type<tc>, window_params = [{transform_indices = @transform_0, window_bounds = array<i64: 1, 4, 256>}, {pipeline_mode = #tpu.pipeline_mode<synchronous>, transform_indices = @transform_1, window_bounds = array<i64: 4, 8>}, {pipeline_mode = #tpu.pipeline_mode<synchronous>, transform_indices = @transform_2, window_bounds = array<i64: 1, 8>}, {pipeline_mode = #tpu.pipeline_mode<synchronous>, transform_indices = @transform_3, window_bounds = array<i64: 8, 4>}, {pipeline_mode = #tpu.pipeline_mode<synchronous>, transform_indices = @transform_4, window_bounds = array<i64: 1, 4>}, {transform_indices = @transform_5, window_bounds = array<i64: 1, 4, 256>}]} {
    %c0 = arith.constant 0 : index
    %c0_0 = arith.constant 0 : index
    %c0_1 = arith.constant 0 : index
    %0 = vector.load %arg1[%c0, %c0_0, %c0_1] : memref<1x4x256xf32, #tpu.memory_space<vmem>>, vector<1x4x256xf32>
    %cst = arith.constant dense<0.000000e+00> : vector<1x4xf32>
    %1 = vector.multi_reduction <add>, %0, %cst [2] : vector<1x4x256xf32> to vector<1x4xf32>
    %cst_2 = arith.constant 3.906250e-03 : f32
    %2 = vector.broadcast %cst_2 : f32 to vector<1x4xf32>
    %3 = arith.mulf %1, %2 : vector<1x4xf32>
    %c0_3 = arith.constant 0 : index
    %c0_4 = arith.constant 0 : index
    %4 = vector.load %arg2[%c0_3, %c0_4] : memref<4x8xf32, #tpu.memory_space<vmem>>, vector<4x8xf32>
    %cst_5 = arith.constant dense<0.000000e+00> : vector<1x8xf32>
    %5 = tpu.matmul %3, %4, %cst_5 {dimension_numbers = #tpu.dot_dimension_numbers<[1], [0], [0], [1], [0, 0, 1, 1], [], []>} : vector<1x4xf32>, vector<4x8xf32>, vector<1x8xf32> -> vector<1x8xf32>
    %c0_6 = arith.constant 0 : index
    %c0_7 = arith.constant 0 : index
    %6 = vector.load %arg3[%c0_6, %c0_7] : memref<1x8xf32, #tpu.memory_space<vmem>>, vector<1x8xf32>
    %7 = arith.addf %5, %6 : vector<1x8xf32>
    %cst_8 = arith.constant 0.000000e+00 : f32
    %8 = vector.broadcast %cst_8 : f32 to vector<1x8xf32>
    %9 = arith.maximumf %7, %8 : vector<1x8xf32>
    %c0_9 = arith.constant 0 : index
    %c0_10 = arith.constant 0 : index
    %10 = vector.load %arg4[%c0_9, %c0_10] : memref<8x4xf32, #tpu.memory_space<vmem>>, vector<8x4xf32>
    %cst_11 = arith.constant dense<0.000000e+00> : vector<1x4xf32>
    %11 = tpu.matmul %9, %10, %cst_11 {dimension_numbers = #tpu.dot_dimension_numbers<[1], [0], [0], [1], [0, 0, 1, 1], [], []>} : vector<1x8xf32>, vector<8x4xf32>, vector<1x4xf32> -> vector<1x4xf32>
    %c0_12 = arith.constant 0 : index
    %c0_13 = arith.constant 0 : index
    %12 = vector.load %arg5[%c0_12, %c0_13] : memref<1x4xf32, #tpu.memory_space<vmem>>, vector<1x4xf32>
    %13 = arith.addf %11, %12 : vector<1x4xf32>
    %cst_14 = arith.constant 3.000000e+00 : f32
    %14 = vector.broadcast %cst_14 : f32 to vector<1x4xf32>
    %15 = arith.addf %13, %14 : vector<1x4xf32>
    %cst_15 = arith.constant 0.000000e+00 : f32
    %cst_16 = arith.constant 6.000000e+00 : f32
    %16 = vector.broadcast %cst_15 : f32 to vector<1x4xf32>
    %17 = arith.maximumf %16, %15 : vector<1x4xf32>
    %18 = vector.broadcast %cst_16 : f32 to vector<1x4xf32>
    %19 = arith.minimumf %18, %17 : vector<1x4xf32>
    %cst_17 = arith.constant 0.166666672 : f32
    %20 = vector.broadcast %cst_17 : f32 to vector<1x4xf32>
    %21 = arith.mulf %19, %20 : vector<1x4xf32>
    %22 = vector.shape_cast %21 : vector<1x4xf32> to vector<1x4x1xf32>
    %23 = vector.broadcast %22 : vector<1x4x1xf32> to vector<1x4x256xf32>
    %24 = arith.mulf %0, %23 : vector<1x4x256xf32>
    %c0_18 = arith.constant 0 : index
    %c0_19 = arith.constant 0 : index
    %c0_20 = arith.constant 0 : index
    %25 = vector.load %arg6[%c0_18, %c0_19, %c0_20] : memref<1x4x256xf32, #tpu.memory_space<vmem>>, vector<1x4x256xf32>
    tpu.vector_store %arg6[%c0_18, %c0_19, %c0_20], %24 {strides = array<i32>} : memref<1x4x256xf32, #tpu.memory_space<vmem>>, vector<1x4x256xf32>,
    return
  }
  func.func @transform_0(%arg0: i32) -> (i32, i32, i32) {
    %c0_i32 = arith.constant 0 : i32
    %c0_i32_0 = arith.constant 0 : i32
    %c0_i32_1 = arith.constant 0 : i32
    return %arg0, %c0_i32, %c0_i32_0 : i32, i32, i32
  }
  func.func @transform_1(%arg0: i32) -> (i32, i32) {
    %c0_i32 = arith.constant 0 : i32
    %c0_i32_0 = arith.constant 0 : i32
    %c0_i32_1 = arith.constant 0 : i32
    return %c0_i32, %c0_i32_0 : i32, i32
  }
  func.func @transform_2(%arg0: i32) -> (i32, i32) {
    %c0_i32 = arith.constant 0 : i32
    %c0_i32_0 = arith.constant 0 : i32
    %c0_i32_1 = arith.constant 0 : i32
    return %c0_i32, %c0_i32_0 : i32, i32
  }
  func.func @transform_3(%arg0: i32) -> (i32, i32) {
    %c0_i32 = arith.constant 0 : i32
    %c0_i32_0 = arith.constant 0 : i32
    %c0_i32_1 = arith.constant 0 : i32
    return %c0_i32, %c0_i32_0 : i32, i32
  }
  func.func @transform_4(%arg0: i32) -> (i32, i32) {
    %c0_i32 = arith.constant 0 : i32
    %c0_i32_0 = arith.constant 0 : i32
    %c0_i32_1 = arith.constant 0 : i32
    return %c0_i32, %c0_i32_0 : i32, i32
  }
  func.func @transform_5(%arg0: i32) -> (i32, i32, i32) {
    %c0_i32 = arith.constant 0 : i32
    %c0_i32_0 = arith.constant 0 : i32
    %c0_i32_1 = arith.constant 0 : i32
    return %arg0, %c0_i32, %c0_i32_0 : i32, i32, i32
  }
}

</mosaic_0001>

<llo_original>
// kernel: tpu_custom_call.1
$region0: #{tpu_custom_call.1}
  #allocation0 [shape = 'u32[]', space=smem, size = 0x4, offset = 0x4, fixed_abs, tag = 'smem constant byte address 0x4 - core index']
  #allocation1 [shape = 'u32[72,128]{1,0:T(1,128)}', space=vmem, size = 0x9000, scoped, tag = 'internal scratch']
  %s0 = inlined_call_operand.hbm [shape: f32[2,4,256], index: 0, kind: input, shape index: {}, may-alias: {0,5}]
  %s1 = inlined_call_operand.vmem [shape: f32[4,8], index: 1, kind: input, shape index: {}]
  %s2 = inlined_call_operand.vmem [shape: f32[1,8], index: 2, kind: input, shape index: {}]
  %s3 = inlined_call_operand.vmem [shape: f32[8,4], index: 3, kind: input, shape index: {}]
  %s4 = inlined_call_operand.vmem [shape: f32[1,4], index: 4, kind: input, shape index: {}]
  %s5 = inlined_call_operand.hbm [shape: f32[2,4,256], index: 5, kind: output, shape index: {}, may-alias: {0,5}]
  %s6 = sld [smem:[#allocation0]]
  $region57: #{tpu_custom_call.1} parent=0
    _
  %s8 = ssub.s32 1, %s6
  %s9 = scalar_select 0, %s8, %s6
  $region1: #{tpu_custom_call.1} parent=0
    #allocation2 [shape = 'u8[8192]{0}', space=vmem, size = 0x2000, scoped, tag = 'input window, operand 0']
    #allocation3 [shape = 's32[2]{0}', space=sflag, size = 0x8, scoped, tag = 'scoped memory for tpu_custom_call.1']
    #allocation4 [shape = 's32[2]{0}', space=sflag, size = 0x8, scoped, tag = 'scoped memory for tpu_custom_call.1']
    #allocation5 [shape = 'u8[8192]{0}', space=vmem, size = 0x2000, scoped, tag = 'output window, operand 0']
    %10 = vsyncpa [#allocation3], 0
    %s11 = scalar_lea.sflag [#allocation3], 1
    %12 = vsyncpa %s11, 0
    %13 = vsyncpa [#allocation4], 0
    %s14 = scalar_lea.sflag [#allocation4], 1
    %15 = vsyncpa %s14, 0
    loop: start=0, step=1, limit=4
    $region2: #{tpu_custom_call.1} parent=1 // loop_pre_header
      _
    $region3: #{tpu_custom_call.1} parent=1 // loop_header
      %s17 = sphi 0, %s21
      %p18 = scmp.ge.s32.totalorder %s17, 4
      %s27 = sphi 0, %s29
      %s30 = sphi 0, %s27
      %s31 = sphi 0, %s30
      %s47 = sphi 0, %s31
      %s51 = sphi 0, %s51
      %s53 = sphi 0, %s51
      %s54 = sphi 0, %s53
      %s68 = sphi 0, %s54
      %s72 = sphi 0, %s72
      %s74 = sphi 0, %s72
      %s75 = sphi 0, %s74
      %s89 = sphi 0, %s75
      %s93 = sphi 0, %s93
      %s95 = sphi 0, %s93
      %s96 = sphi 0, %s95
      %s110 = sphi 0, %s96
      %s114 = sphi 0, %s114
      %s116 = sphi 0, %s114
      %s117 = sphi 0, %s116
      %s131 = sphi 0, %s117
      %s137 = sphi 0, %s139
      %s140 = sphi 0, %s137
      %s141 = sphi 0, %s140
      %s157 = sphi 0, %s141
    $region4: #{tpu_custom_call.1} parent=1 // loop_header_branch
      %20 = sbr.rel (%p18) target = $region8
    $region5: #{tpu_custom_call.1} parent=1 // loop_body
      %s22 = ssub.s32 %s17, 1
      %s23 = ssub.s32 %s17, 2
      %s24 = sadd.s32 %s17, 1
      %s25 = ssub.s32 %s17, %s24
      %p26 = scmp.eq.s32.totalorder %s25, 0
      %s28 = sadd.s32 %s27, 1
      %s29 = scalar_select %p26, %s27, %s28
      %p32 = pneg %p26
      %p33 = scmp.eq.s32.totalorder %s17, 1
      %p34 = por %p32, %p33
      %p35 = scmp.ne.s32.totalorder %s27, %s30
      %p36 = scmp.eq.s32.totalorder %s17, 0
      %p37 = por %p35, %p36
      %p38 = scmp.ne.s32.totalorder %s27, %s30
      %p39 = scmp.eq.s32.totalorder %s22, 1
      %p40 = por %p38, %p39
      %p41 = scmp.ne.s32.totalorder %s30, %s31
      %p42 = scmp.eq.s32.totalorder %s22, 0
      %p43 = por %p41, %p42
      %p44 = scmp.ne.s32.totalorder %s30, %s31
      %p45 = scmp.eq.s32.totalorder %s23, 1
      %p46 = por %p44, %p45
      %p48 = scmp.ne.s32.totalorder %s31, %s47
      %p49 = scmp.eq.s32.totalorder %s23, 0
      %p50 = por %p48, %p49
      %s52 = sadd.s32 %s51, 1
      %p55 = scmp.eq.s32.totalorder %s17, 1
      %p56 = scmp.ne.s32.totalorder %s51, %s53
      %p57 = scmp.eq.s32.totalorder %s17, 0
      %p58 = por %p56, %p57
      %p59 = scmp.ne.s32.totalorder %s51, %s53
      %p60 = scmp.eq.s32.totalorder %s22, 1
      %p61 = por %p59, %p60
      %p62 = scmp.ne.s32.totalorder %s53, %s54
      %p63 = scmp.eq.s32.totalorder %s22, 0
      %p64 = por %p62, %p63
      %p65 = scmp.ne.s32.totalorder %s53, %s54
      %p66 = scmp.eq.s32.totalorder %s23, 1
      %p67 = por %p65, %p66
      %p69 = scmp.ne.s32.totalorder %s54, %s68
      %p70 = scmp.eq.s32.totalorder %s23, 0
      %p71 = por %p69, %p70
      %s73 = sadd.s32 %s72, 1
      %p76 = scmp.eq.s32.totalorder %s17, 1
      %p77 = scmp.ne.s32.totalorder %s72, %s74
      %p78 = scmp.eq.s32.totalorder %s17, 0
      %p79 = por %p77, %p78
      %p80 = scmp.ne.s32.totalorder %s72, %s74
      %p81 = scmp.eq.s32.totalorder %s22, 1
      %p82 = por %p80, %p81
      %p83 = scmp.ne.s32.totalorder %s74, %s75
      %p84 = scmp.eq.s32.totalorder %s22, 0
      %p85 = por %p83, %p84
      %p86 = scmp.ne.s32.totalorder %s74, %s75
      %p87 = scmp.eq.s32.totalorder %s23, 1
      %p88 = por %p86, %p87
      %p90 = scmp.ne.s32.totalorder %s75, %s89
      %p91 = scmp.eq.s32.totalorder %s23, 0
      %p92 = por %p90, %p91
      %s94 = sadd.s32 %s93, 1
      %p97 = scmp.eq.s32.totalorder %s17, 1
      %p98 = scmp.ne.s32.totalorder %s93, %s95
      %p99 = scmp.eq.s32.totalorder %s17, 0
      %p100 = por %p98, %p99
      %p101 = scmp.ne.s32.totalorder %s93, %s95
      %p102 = scmp.eq.s32.totalorder %s22, 1
      %p103 = por %p101, %p102
      %p104 = scmp.ne.s32.totalorder %s95, %s96
      %p105 = scmp.eq.s32.totalorder %s22, 0
      %p106 = por %p104, %p105
      %p107 = scmp.ne.s32.totalorder %s95, %s96
      %p108 = scmp.eq.s32.totalorder %s23, 1
      %p109 = por %p107, %p108
      %p111 = scmp.ne.s32.totalorder %s96, %s110
      %p112 = scmp.eq.s32.totalorder %s23, 0
      %p113 = por %p111, %p112
      %s115 = sadd.s32 %s114, 1
      %p118 = scmp.eq.s32.totalorder %s17, 1
      %p119 = scmp.ne.s32.totalorder %s114, %s116
      %p120 = scmp.eq.s32.totalorder %s17, 0
      %p121 = por %p119, %p120
      %p122 = scmp.ne.s32.totalorder %s114, %s116
      %p123 = scmp.eq.s32.totalorder %s22, 1
      %p124 = por %p122, %p123
      %p125 = scmp.ne.s32.totalorder %s116, %s117
      %p126 = scmp.eq.s32.totalorder %s22, 0
      %p127 = por %p125, %p126
      %p128 = scmp.ne.s32.totalorder %s116, %s117
      %p129 = scmp.eq.s32.totalorder %s23, 1
      %p130 = por %p128, %p129
      %p132 = scmp.ne.s32.totalorder %s117, %s131
      %p133 = scmp.eq.s32.totalorder %s23, 0
      %p134 = por %p132, %p133
      %s135 = ssub.s32 %s17, %s24
      %p136 = scmp.eq.s32.totalorder %s135, 0
      %s138 = sadd.s32 %s137, 1
      %s139 = scalar_select %p136, %s137, %s138
      %p142 = pneg %p136
      %p143 = scmp.eq.s32.totalorder %s17, 1
      %p144 = por %p142, %p143
      %p145 = scmp.ne.s32.totalorder %s137, %s140
      %p146 = scmp.eq.s32.totalorder %s17, 0
      %p147 = por %p145, %p146
      %p148 = scmp.ne.s32.totalorder %s137, %s140
      %p149 = scmp.eq.s32.totalorder %s22, 1
      %p150 = por %p148, %p149
      %p151 = scmp.ne.s32.totalorder %s140, %s141
      %p152 = scmp.eq.s32.totalorder %s22, 0
      %p153 = por %p151, %p152
      %p154 = scmp.ne.s32.totalorder %s140, %s141
      %p155 = scmp.eq.s32.totalorder %s23, 1
      %p156 = por %p154, %p155
      %p158 = scmp.ne.s32.totalorder %s141, %s157
      %p159 = scmp.eq.s32.totalorder %s23, 0
      %p160 = por %p158, %p159
      %p161 = scmp.le.s32.totalorder 1, %s17
      %p162 = scmp.lt.s32.totalorder %s17, 3
      %p163 = pnand %p161, %p162
      %p164 = pneg %p163
      // Predicated region
      $region9: #{tpu_custom_call.1} parent=5 // pred_check
        _
      $region10: #{tpu_custom_call.1} parent=5 // pred_check_branch
        %166 = sbr.rel (%p163) target = $region12
      $region11: #{tpu_custom_call.1} parent=5 // pred_region
        %s167 = ssub.s32 %s17, 1
        // Predicated region
        $region13: #{tpu_custom_call.1} parent=11 // pred_check
          %p168 = pneg %p64
        $region14: #{tpu_custom_call.1} parent=11 // pred_check_branch
          %170 = sbr.rel (%p168) target = $region16
        $region15: #{tpu_custom_call.1} parent=11 // pred_region
          _
        $region16: #{tpu_custom_call.1} parent=11 // pred_fallthru
          _
        // Predicated region
        $region17: #{tpu_custom_call.1} parent=11 // pred_check
          %p171 = pneg %p85
        $region18: #{tpu_custom_call.1} parent=11 // pred_check_branch
          %173 = sbr.rel (%p171) target = $region20
        $region19: #{tpu_custom_call.1} parent=11 // pred_region
          _
        $region20: #{tpu_custom_call.1} parent=11 // pred_fallthru
          _
        // Predicated region
        $region21: #{tpu_custom_call.1} parent=11 // pred_check
          %p174 = pneg %p106
        $region22: #{tpu_custom_call.1} parent=11 // pred_check_branch
          %176 = sbr.rel (%p174) target = $region24
        $region23: #{tpu_custom_call.1} parent=11 // pred_region
          _
        $region24: #{tpu_custom_call.1} parent=11 // pred_fallthru
          _
        // Predicated region
        $region25: #{tpu_custom_call.1} parent=11 // pred_check
          %p177 = pneg %p127
        $region26: #{tpu_custom_call.1} parent=11 // pred_check_branch
          %179 = sbr.rel (%p177) target = $region28
        $region27: #{tpu_custom_call.1} parent=11 // pred_region
          _
        $region28: #{tpu_custom_call.1} parent=11 // pred_fallthru
          _
      $region12: #{tpu_custom_call.1} parent=5 // pred_fallthru
        _
      %p180 = scmp.lt.s32.totalorder %s17, 2
      // Predicated region
      $region29: #{tpu_custom_call.1} parent=5 // pred_check
        %p181 = pneg %p180
      $region30: #{tpu_custom_call.1} parent=5 // pred_check_branch
        %183 = sbr.rel (%p181) target = $region32
      $region31: #{tpu_custom_call.1} parent=5 // pred_region
        // Predicated region
        $region33: #{tpu_custom_call.1} parent=31 // pred_check
          %p184 = pneg %p37
        $region34: #{tpu_custom_call.1} parent=31 // pred_check_branch
          %186 = sbr.rel (%p184) target = $region36
        $region35: #{tpu_custom_call.1} parent=31 // pred_region
          %s187 = sand.u32 %s27, 1
          %s188 = scalar_lea.sflag [#allocation3], %s187
          %s189 = sand.u32 %s27, 1
          %s190 = smul.addr %s189, 8
          %s191 = scalar_lea.vmem [#allocation2], %s190
          %193 = vsyncadd %s188, 0
          %s194 = smul.addr %s17, 2
          %s195 = smul.addr %s194, 4
          %s196 = scalar_lea.hbm %s0, %s195
          %s198 = sshll.u32 %s196, 4
          %s199 = int_to_ptr.hbm [resolvable:$true] %s198
          %s200 = sshll.u32 %s191, 4
          %s201 = int_to_ptr.vmem [resolvable:$true] %s200
          %203 = dma.hbm_to_vmem [thread:$0]  %s199, 128, %s201, %s188
        $region36: #{tpu_custom_call.1} parent=31 // pred_fallthru
          _
      $region32: #{tpu_custom_call.1} parent=5 // pred_fallthru
        _
      %p204 = scmp.le.s32.totalorder 1, %s17
      %p205 = scmp.lt.s32.totalorder %s17, 3
      %p206 = pnand %p204, %p205
      %p207 = pneg %p206
      // Predicated region
      $region37: #{tpu_custom_call.1} parent=5 // pred_check
        _
      $region38: #{tpu_custom_call.1} parent=5 // pred_check_branch
        %209 = sbr.rel (%p206) target = $region40
      $region39: #{tpu_custom_call.1} parent=5 // pred_region
        %s210 = ssub.s32 %s17, 1
        %s211 = sand.u32 %s30, 1
        %s212 = scalar_lea.sflag [#allocation3], %s211
        %s213 = sand.u32 %s30, 1
        %s214 = smul.addr %s213, 8
        %s215 = scalar_lea.vmem [#allocation2], %s214
        // Predicated region
        $region41: #{tpu_custom_call.1} parent=39 // pred_check
          %p216 = pneg %p43
        $region42: #{tpu_custom_call.1} parent=39 // pred_check_branch
          %218 = sbr.rel (%p216) target = $region44
        $region43: #{tpu_custom_call.1} parent=39 // pred_region
          %220 = dma.done %s212, 128
        $region44: #{tpu_custom_call.1} parent=39 // pred_fallthru
          _
        %s221 = sand.u32 %s30, 1
        %s222 = scalar_lea.sflag [#allocation3], %s221
        %s223 = sand.u32 %s30, 1
        %s224 = smul.addr %s223, 8
        %s225 = scalar_lea.vmem [#allocation2], %s224
        %p226 = pneg %p43
        %p227 = pneg %p40
        %p228 = pneg %p64
        %p229 = pneg %p61
        %p230 = pneg %p85
        %p231 = pneg %p82
        %p232 = pneg %p106
        %p233 = pneg %p103
        %p234 = pneg %p127
        %p235 = pneg %p124
        %p236 = pneg %p153
        %p237 = pneg %p150
        %s238 = sand.u32 %s140, 1
        %s239 = scalar_lea.sflag [#allocation4], %s238
        %s240 = sand.u32 %s140, 1
        %s241 = smul.addr %s240, 8
        %s242 = scalar_lea.vmem [#allocation5], %s241
        %v243 = vld [vmem:[%s215] sm:$0xff]
        %245 = vst [vmem:[#allocation1] ss:$2 sm:$0xff] %v243
        %v246 = vld.sshfl [vmem:[#allocation1] sm:$0xff pattern:$0x75316420]
        %v247 = vld.sshfl [vmem:[#allocation1 + $0x8] sm:$0xff pattern:$0x75316420]
        %vm250 = vcmask 1043456
        %v251 = vsel %vm250, %v246, 0.0
        %v252 = vsel %vm250, %v247, 0.0
        %v253 = vadd.f32 %v251, %v252
        %254 = vadd.xlane.f32.xlu0 %v253
        %v255 = vpop.xlane.xlu0 %254
        %v256 = vmul.f32 %v255, 0.00390625
        %v257 = vld [vmem:[%s1] sm:$0xf]
        %v258 = vld [vmem:[%s2] sm:$0x1]
        %v260 = vlaneseq
        %v261 = vand.u32 %v260, 127
        %v262 = vperm.slane %v256, %v261
        %vm263 = vcmask 31744
        %v264 = vsel %vm263, %v262, 0
        %v267 = vsel %vm250, %v257, 0
        %269 = vmatpush.msra.mxu0 0.0
        %270 = vmatpush.msra.mxu0 0.0
        %271 = vmatpush.msra.mxu0 0.0
        %272 = vmatpush.msra.mxu0 0.0
        %273 = vmatpush.msra.mxu0 0.0
        %274 = vmatpush.msra.mxu0 0.0
        %275 = vmatpush.msra.mxu0 0.0
        %276 = vmatpush.msra.mxu0 0.0
        %277 = vmatpush.msra.mxu0 0.0
        %278 = vmatpush.msra.mxu0 0.0
        %279 = vmatpush.msra.mxu0 0.0
        %280 = vmatpush.msra.mxu0 0.0
        %281 = vmatpush.msra.mxu0 0.0
        %282 = vmatpush.msra.mxu0 0.0
        %283 = vmatpush.msra.mxu0 0.0
        %284 = vmatpush.msra.mxu0 %v267
        %285 = vmatmul.f32.gmra.mxu0 %v264
        %v286 = vpop.f32.mrf.mxu0
        %v287 = vadd.f32 %v258, %v286
        %288 = vdwg.mxu0
        %v289 = vmax.f32 %v287, 0.0
        %v290 = vld [vmem:[%s3] sm:$0xff]
        %v291 = vld [vmem:[%s4] sm:$0x1]
        %vm292 = vcmask 64512
        %v294 = vsel %vm292, %v289, 0
        %296 = vmatpush.msra.mxu0 0.0
        %297 = vmatpush.msra.mxu0 0.0
        %298 = vmatpush.msra.mxu0 0.0
        %299 = vmatpush.msra.mxu0 0.0
        %300 = vmatpush.msra.mxu0 0.0
        %301 = vmatpush.msra.mxu0 0.0
        %302 = vmatpush.msra.mxu0 0.0
        %303 = vmatpush.msra.mxu0 0.0
        %304 = vmatpush.msra.mxu0 0.0
        %305 = vmatpush.msra.mxu0 0.0
        %306 = vmatpush.msra.mxu0 0.0
        %307 = vmatpush.msra.mxu0 0.0
        %308 = vmatpush.msra.mxu0 0.0
        %309 = vmatpush.msra.mxu0 0.0
        %310 = vmatpush.msra.mxu0 0.0
        %311 = vmatpush.msra.mxu0 %v290
        %312 = vmatmul.f32.gmra.mxu0 %v294
        %v313 = vpop.f32.mrf.mxu0
        %v314 = vadd.f32 %v291, %v313
        %315 = vdwg.mxu0
        %v316 = vadd.f32 %v314, 3.0
        %v317 = vmax.f32 %v316, 0.0
        %v318 = vmin.f32 %v317, 6.0
        %v319 = vmul.f32 %v318, 0.16666667
        %v320 = vperm.slane %v319, 0
        %v321 = vlaneseq
        %v322 = vshrl.u32 %v321, 7
        %324 = vset.pattern.permute.xlu0 %v322
        %325 = vperm.xlu0 %324, %v320
        %v326 = vpop.permute.xlu0 %325
        %v329 = vunpack.c.l.s4 839922192
        %v330 = vunpack.c.0.s8 %v329
        %v331 = vperm.slane %v326, %v330
        %v333 = vmul.f32 %v243, %v331
        %334 = vst [vmem:[%s242] sm:$0xff] %v333
        %s335 = sand.u32 %s140, 1
        %s336 = scalar_lea.sflag [#allocation4], %s335
        %s337 = sand.u32 %s140, 1
        %s338 = smul.addr %s337, 8
        %s339 = scalar_lea.vmem [#allocation5], %s338
        // Predicated region
        $region45: #{tpu_custom_call.1} parent=39 // pred_check
          %p340 = pneg %p150
        $region46: #{tpu_custom_call.1} parent=39 // pred_check_branch
          %342 = sbr.rel (%p340) target = $region48
        $region47: #{tpu_custom_call.1} parent=39 // pred_region
          %344 = vsyncadd %s336, 0
          %s345 = smul.addr %s22, 2
          %s346 = smul.addr %s345, 4
          %s347 = scalar_lea.hbm %s5, %s346
          %s349 = sshll.u32 %s339, 4
          %s350 = int_to_ptr.vmem [resolvable:$true] %s349
          %s351 = sshll.u32 %s347, 4
          %s352 = int_to_ptr.hbm [resolvable:$true] %s351
          %354 = dma.vmem_to_hbm [thread:$0]  %s350, 128, %s352, %s336
        $region48: #{tpu_custom_call.1} parent=39 // pred_fallthru
          _
      $region40: #{tpu_custom_call.1} parent=5 // pred_fallthru
        _
      %p355 = scmp.le.s32.totalorder 2, %s17
      // Predicated region
      $region49: #{tpu_custom_call.1} parent=5 // pred_check
        %p356 = pneg %p355
      $region50: #{tpu_custom_call.1} parent=5 // pred_check_branch
        %358 = sbr.rel (%p356) target = $region52
      $region51: #{tpu_custom_call.1} parent=5 // pred_region
        %s359 = ssub.s32 %s17, 2
        // Predicated region
        $region53: #{tpu_custom_call.1} parent=51 // pred_check
          %p360 = pneg %p156
        $region54: #{tpu_custom_call.1} parent=51 // pred_check_branch
          %362 = sbr.rel (%p360) target = $region56
        $region55: #{tpu_custom_call.1} parent=51 // pred_region
          %s363 = sand.u32 %s141, 1
          %s364 = scalar_lea.sflag [#allocation4], %s363
          %s365 = sand.u32 %s141, 1
          %s366 = smul.addr %s365, 8
          %s367 = scalar_lea.vmem [#allocation5], %s366
          %369 = dma.done %s364, 128
        $region56: #{tpu_custom_call.1} parent=51 // pred_fallthru
          _
      $region52: #{tpu_custom_call.1} parent=5 // pred_fallthru
        _
    $region6: #{tpu_custom_call.1} parent=1 // loop_footer
      %s21 = sadd.s32 1, %s17
    $region7: #{tpu_custom_call.1} parent=1 // loop_footer_branch
      %16 = sbr.rel target = $region3
    $region8: #{tpu_custom_call.1} parent=1 // loop_exit
      _
    %370 = vsyncpa [#allocation3], 1
    %s371 = scalar_lea.sflag [#allocation3], 1
    %372 = vsyncpa %s371, 1
    %373 = vsyncpa [#allocation4], 1
    %s374 = scalar_lea.sflag [#allocation4], 1
    %375 = vsyncpa %s374, 1

</llo_original>
